<compile_context>
chip_gen: v5e
topology: v5e:2x2
jax: 0.10.0
libtpu: 0.0.40
codegen_flags: <defaults>
</compile_context>

<pallas_src>
import math

import jax
import jax.numpy as jnp
from jax.experimental import pallas as pl
from jax.experimental.pallas import tpu as pltpu


_NEG_BIG = -1e30  # finite "-inf" for padded vocab columns (keeps exp/log NaN-free)


def _round_up(x, m):
    return ((x + m - 1) // m) * m


def _vmem_capacity_bytes():
    """Physical VMEM per core; conservative fallback if the query fails."""
    try:
        info = pltpu.get_tpu_info()
        for attr in ("vmem_capacity_bytes", "vmem_bytes", "vmem_size_bytes"):
            val = getattr(info, attr, None)
            if val:
                return int(val)
    except Exception:
        pass
    return 64 << 20  # v7x per-TC size: safe lower bound on all generations


def _vmem_estimate(tm, d, tv, out_itemsize):
    """Rough double-buffered VMEM footprint of the main kernel (bytes)."""
    return (2 * tm * d * 2                 # x row tile, bf16
            + 2 * d * tv * 2               # weight slab, bf16
            + 2 * tv * 4                   # bias slab, f32
            + 2 * tm * tv * out_itemsize   # output block
            + 4 * tm * 4                   # m_save + lse side outputs
            + 2 * tm * 4)                  # running max / sum-exp scratch


def _auto_tile_m(n_rows, d, tv, out_itemsize, budget):
    """Largest MXU-friendly row tile whose footprint fits the VMEM budget."""
    cap = _round_up(max(n_rows, 1), 8)
    for tm in (1024, 768, 512, 256, 128, 64, 32, 16, 8):
        tm = min(tm, cap)
        if _vmem_estimate(tm, d, tv, out_itemsize) <= budget:
            return tm
    return min(8, cap)


def _projection_kernel(x_ref, w_ref, b_ref, o_ref, msave_ref, lse_ref,
                       m_ref, l_ref):
    """One (row_tile, vocab_tile) grid step of the single-pass projection.

    x_ref: (TM, D) bf16   w_ref: (D, TV) bf16   b_ref: (1, TV) f32
    o_ref: (TM, TV)       msave_ref: (1, TM, 1) f32   lse_ref: (TM, 1) f32
    m_ref / l_ref: (TM, 1) f32 scratch, persistent across the vocab axis.
    """
    j = pl.program_id(1)

    @pl.when(j == 0)
    def _init():
        m_ref[...] = jnp.full_like(m_ref, -jnp.inf)
        l_ref[...] = jnp.zeros_like(l_ref)

    # bf16 x bf16 -> f32 on the MXU; bias add + softmax math stay in f32.
    logits = jnp.dot(x_ref[...], w_ref[...], preferred_element_type=jnp.float32)
    logits = logits + b_ref[...]                       # (TM, TV) f32

    m_prev = m_ref[...]
    m_new = jnp.maximum(m_prev, jnp.max(logits, axis=-1, keepdims=True))
    l_ref[...] = (l_ref[...] * jnp.exp(m_prev - m_new)
                  + jnp.sum(jnp.exp(logits - m_new), axis=-1, keepdims=True))
    m_ref[...] = m_new

    # Centered partial result (<= 0, bf16-friendly); fix-up adds (m_new - lse).
    o_ref[...] = (logits - m_new).astype(o_ref.dtype)
    msave_ref[...] = m_new.reshape(msave_ref.shape)

    @pl.when(j == pl.num_programs(1) - 1)
    def _finalize():
        # logsumexp computed exactly once per row tile.
        lse_ref[...] = m_ref[...] + jnp.log(l_ref[...])


def _fixup_kernel(o_in_ref, msave_ref, lse_ref, o_ref):
    """out = partial + (saved running max - logsumexp), in place on the output."""
    shift = msave_ref[0] - lse_ref[...]                # (TM, 1) f32
    o_ref[...] = (o_in_ref[...].astype(jnp.float32) + shift).astype(o_ref.dtype)


def prepare_projection_params(weight, bias, *, tile_v=512):
    """One-time parameter prep (outside the hot path).

    weight: (V, D) f32 (PyTorch nn.Linear layout), bias: (V,) f32.
    Returns (w_dv, bias_row, vocab_size, tile_v) with:
      w_dv     : (D, Vp) bf16, vocab padded with zero columns
      bias_row : (1, Vp) f32; padded columns get a huge negative bias so they
                 never win the max nor contribute to the sum-exp.
    """
    V, D = weight.shape
    assert V >= 1
    # tile_v=512 keeps vocab padding small for typical vocabs (e.g. 50257 -> +431).
    tv = _round_up(min(int(tile_v), _round_up(V, 128)), 128)
    Vp = _round_up(V, tv)
    # Invariant: every vocab tile contains at least one real column; an
    # all-padding tile would poison the online sum-exp.
    assert Vp - V < tv
    # TODO(synk): on v7x, store the weight as fp8 (e4m3) with per-column scales
    # folded into the f32 bias path to halve the dominant weight HBM stream.
    w_dv = jnp.pad(weight.T.astype(jnp.bfloat16), ((0, 0), (0, Vp - V)))
    b = jnp.pad(bias.astype(jnp.float32), (0, Vp - V), constant_values=_NEG_BIG)
    return w_dv, b.reshape(1, Vp), V, tv


def projection_forward(x, w_dv, bias_row, vocab_size, *, tile_v, tile_m=None,
                       out_dtype=None):
    """log_softmax(x @ W^T + b, axis=-1).  x: (B, S, D) float."""
    B, S, D = x.shape
    Dw, Vp = w_dv.shape
    tv = int(tile_v)
    assert Dw == D and Vp % tv == 0
    N = B * S
    out_dtype = x.dtype if out_dtype is None else jnp.dtype(out_dtype)
    out_itemsize = jnp.dtype(out_dtype).itemsize
    # TODO(synk): for NLL / top-k consumers, emit bf16 (out_dtype=jnp.bfloat16)
    # or fuse the target-logit gather so the (N, V) matrix is never written.

    capacity = _vmem_capacity_bytes()                  # generation-aware budget
    hard_cap = max(capacity - (16 << 20), 32 << 20)    # ~112 MiB on 128 MiB parts

    if tile_m is None:
        tm = _auto_tile_m(N, D, tv, out_itemsize, hard_cap - (8 << 20))
    else:
        tm = _round_up(min(int(tile_m), _round_up(N, 8)), 8)
    Np = _round_up(N, tm)

    x2 = x.reshape(N, D).astype(jnp.bfloat16)          # bf16 activations for MXU
    if Np != N:
        x2 = jnp.pad(x2, ((0, Np - N), (0, 0)))

    num_row_tiles = Np // tm       # keep >= 2 on v7x so both TensorCores are used
    num_vocab_tiles = Vp // tv

    est = _vmem_estimate(tm, D, tv, out_itemsize)
    vmem_limit = int(min(max(est + (8 << 20), 32 << 20), hard_cap))

    # ---- Stage 1: single sweep over the weight (matmul + online softmax stats).
    # TODO(synk): on v7x, single-buffer the resident x tile
    # (pipeline_mode=pl.Buffered(1)) to halve its footprint at tm >= 1024.
    out_partial, m_save, lse = pl.pallas_call(
        _projection_kernel,
        out_shape=(
            jax.ShapeDtypeStruct((Np, Vp), out_dtype),
            jax.ShapeDtypeStruct((num_vocab_tiles, Np, 1), jnp.float32),
            jax.ShapeDtypeStruct((Np, 1), jnp.float32),
        ),
        grid_spec=pltpu.PrefetchScalarGridSpec(
            num_scalar_prefetch=0,
            grid=(num_row_tiles, num_vocab_tiles),
            in_specs=[
                pl.BlockSpec((tm, D), lambda i, j: (i, 0)),    # x row tile (resident per i)
                pl.BlockSpec((D, tv), lambda i, j: (0, j)),    # weight column slab
                pl.BlockSpec((1, tv), lambda i, j: (0, j)),    # bias slab
            ],
            out_specs=[
                pl.BlockSpec((tm, tv), lambda i, j: (i, j)),       # centered logits
                pl.BlockSpec((1, tm, 1), lambda i, j: (j, i, 0)),  # running max / block
                pl.BlockSpec((tm, 1), lambda i, j: (i, 0)),        # logsumexp / row
            ],
            scratch_shapes=[
                pltpu.VMEM((tm, 1), jnp.float32),   # running max
                pltpu.VMEM((tm, 1), jnp.float32),   # running sum-exp
            ],
        ),
        compiler_params=pltpu.CompilerParams(
            dimension_semantics=("parallel", "arbitrary"),
            vmem_limit_bytes=vmem_limit,
        ),
    )(x2, w_dv, bias_row)

    # ---- Stage 2: cheap elementwise fix-up, in place on the big output.
    # One extra read+write of (N, V) replaces a full second weight sweep and
    # half the MXU FLOPs (cheaper whenever tm < D/4, and it overlaps DMA).
    out = pl.pallas_call(
        _fixup_kernel,
        out_shape=jax.ShapeDtypeStruct((Np, Vp), out_dtype),
        grid_spec=pltpu.PrefetchScalarGridSpec(
            num_scalar_prefetch=0,
            grid=(num_row_tiles, num_vocab_tiles),
            in_specs=[
                pl.BlockSpec((tm, tv), lambda i, j: (i, j)),
                pl.BlockSpec((1, tm, 1), lambda i, j: (j, i, 0)),
                pl.BlockSpec((tm, 1), lambda i, j: (i, 0)),
            ],
            out_specs=pl.BlockSpec((tm, tv), lambda i, j: (i, j)),
        ),
        input_output_aliases={0: 0},   # fix up the partial output in place
        compiler_params=pltpu.CompilerParams(
            dimension_semantics=("parallel", "arbitrary"),
            vmem_limit_bytes=vmem_limit,
        ),
    )(out_partial, m_save, lse)

    # Only pay the (N, V) copy when padding was actually added.
    if Np != N or Vp != vocab_size:
        out = out[:N, :vocab_size]
    return out.reshape(B, S, vocab_size)


if __name__ == "__main__":
    # Small shapes consistent with the module; vocab/rows chosen so both the
    # vocab-padding (Vp > V) and row-padding (Np > N) paths are exercised.
    batch, seq, d_model, vocab_size = 2, 7, 32, 100

    key = jax.random.PRNGKey(0)
    kx, kw, kb = jax.random.split(key, 3)

    # nn.Linear default init: uniform in +/- 1/sqrt(in_features).
    bound = 1.0 / math.sqrt(d_model)
    weight = jax.random.uniform(kw, (vocab_size, d_model), jnp.float32,
                                minval=-bound, maxval=bound)
    bias = jax.random.uniform(kb, (vocab_size,), jnp.float32,
                              minval=-bound, maxval=bound)
    x = jax.random.normal(kx, (batch, seq, d_model), jnp.float32)

    # One-time parameter prep (transpose + bf16 cast + vocab padding).
    w_dv, b_row, V, tv = prepare_projection_params(weight, bias, tile_v=512)

    out = projection_forward(x, w_dv, b_row, V, tile_v=tv, out_dtype=jnp.float32)
    out = jax.block_until_ready(out)

    # Reference: same math as torch.log_softmax(self.proj(x), dim=-1) in f32.
    ref = jax.nn.log_softmax(x @ weight.T + bias, axis=-1)
    assert out.shape == (batch, seq, vocab_size)
    # Tolerance accounts for the bf16 matmul inputs (f32 accumulation).
    assert jnp.allclose(out, ref, atol=2e-2, rtol=2e-2), \
        float(jnp.max(jnp.abs(out - ref)))

    print("KERNEL_OK")
</pallas_src>

<mosaic_0001>
module attributes {stable_mosaic.version = 11 : i64} {
  func.func @_projection_kernel(%arg0: i32, %arg1: i32, %arg2: memref<16x32xbf16, #tpu.memory_space<vmem>>, %arg3: memref<32x128xbf16, #tpu.memory_space<vmem>>, %arg4: memref<1x128xf32, #tpu.memory_space<vmem>>, %arg5: memref<16x128xf32, #tpu.memory_space<vmem>>, %arg6: memref<1x16x1xf32, #tpu.memory_space<vmem>>, %arg7: memref<16x1xf32, #tpu.memory_space<vmem>>, %arg8: memref<16x1xf32, #tpu.memory_space<vmem>>, %arg9: memref<16x1xf32, #tpu.memory_space<vmem>>) attributes {dimension_semantics = [#tpu.dimension_semantics<parallel>, #tpu.dimension_semantics<arbitrary>], iteration_bounds = array<i64: 1, 1>, scalar_prefetch = 0 : i64, scratch_operands = 2 : i64, tpu.core_type = #tpu.core_type<tc>, window_params = [{transform_indices = @transform_0, window_bounds = array<i64: 16, 32>}, {transform_indices = @transform_1, window_bounds = array<i64: 32, 128>}, {transform_indices = @transform_2, window_bounds = array<i64: 1, 128>}, {transform_indices = @transform_3, window_bounds = array<i64: 16, 128>}, {transform_indices = @transform_4, window_bounds = array<i64: 1, 16, 1>}, {transform_indices = @transform_5, window_bounds = array<i64: 16, 1>}]} {
    %c0_i32 = arith.constant 0 : i32
    %0 = arith.cmpi eq, %arg1, %c0_i32 : i32
    %1 = arith.extui %0 : i1 to i32
    %c0_i32_0 = arith.constant 0 : i32
    %2 = arith.cmpi ne, %1, %c0_i32_0 : i32
    scf.if %2 {
      %cst_23 = arith.constant 0xFF800000 : f32
      %33 = vector.broadcast %cst_23 : f32 to vector<16x1xf32>
      %c0_24 = arith.constant 0 : index
      %c0_25 = arith.constant 0 : index
      %34 = vector.load %arg8[%c0_24, %c0_25] : memref<16x1xf32, #tpu.memory_space<vmem>>, vector<16x1xf32>
      tpu.vector_store %arg8[%c0_24, %c0_25], %33 {strides = array<i32>} : memref<16x1xf32, #tpu.memory_space<vmem>>, vector<16x1xf32>,
      %cst_26 = arith.constant 0.000000e+00 : f32
      %35 = vector.broadcast %cst_26 : f32 to vector<16x1xf32>
      %c0_27 = arith.constant 0 : index
      %c0_28 = arith.constant 0 : index
      %36 = vector.load %arg9[%c0_27, %c0_28] : memref<16x1xf32, #tpu.memory_space<vmem>>, vector<16x1xf32>
      tpu.vector_store %arg9[%c0_27, %c0_28], %35 {strides = array<i32>} : memref<16x1xf32, #tpu.memory_space<vmem>>, vector<16x1xf32>,
    } else {
    }
    %c0 = arith.constant 0 : index
    %c0_1 = arith.constant 0 : index
    %3 = vector.load %arg2[%c0, %c0_1] : memref<16x32xbf16, #tpu.memory_space<vmem>>, vector<16x32xbf16>
    %c0_2 = arith.constant 0 : index
    %c0_3 = arith.constant 0 : index
    %4 = vector.load %arg3[%c0_2, %c0_3] : memref<32x128xbf16, #tpu.memory_space<vmem>>, vector<32x128xbf16>
    %cst = arith.constant dense<0.000000e+00> : vector<16x128xf32>
    %5 = tpu.matmul %3, %4, %cst {dimension_numbers = #tpu.dot_dimension_numbers<[1], [0], [0], [1], [0, 0, 1, 1], [], []>} : vector<16x32xbf16>, vector<32x128xbf16>, vector<16x128xf32> -> vector<16x128xf32>
    %c0_4 = arith.constant 0 : index
    %c0_5 = arith.constant 0 : index
    %6 = vector.load %arg4[%c0_4, %c0_5] : memref<1x128xf32, #tpu.memory_space<vmem>>, vector<1x128xf32>
    %7 = vector.broadcast %6 : vector<1x128xf32> to vector<16x128xf32>
    %8 = arith.addf %5, %7 : vector<16x128xf32>
    %c0_6 = arith.constant 0 : index
    %c0_7 = arith.constant 0 : index
    %9 = vector.load %arg8[%c0_6, %c0_7] : memref<16x1xf32, #tpu.memory_space<vmem>>, vector<16x1xf32>
    %cst_8 = arith.constant dense<0xFF800000> : vector<16xf32>
    %10 = vector.multi_reduction <maximumf>, %8, %cst_8 [1] : vector<16x128xf32> to vector<16xf32>
    %11 = vector.shape_cast %10 : vector<16xf32> to vector<16x1xf32>
    %12 = arith.maximumf %9, %11 : vector<16x1xf32>
    %c0_9 = arith.constant 0 : index
    %c0_10 = arith.constant 0 : index
    %13 = vector.load %arg9[%c0_9, %c0_10] : memref<16x1xf32, #tpu.memory_space<vmem>>, vector<16x1xf32>
    %14 = arith.subf %9, %12 : vector<16x1xf32>
    %15 = math.exp %14 : vector<16x1xf32>
    %16 = arith.mulf %13, %15 : vector<16x1xf32>
    %17 = vector.broadcast %12 : vector<16x1xf32> to vector<16x128xf32>
    %18 = arith.subf %8, %17 : vector<16x128xf32>
    %19 = math.exp %18 : vector<16x128xf32>
    %cst_11 = arith.constant dense<0.000000e+00> : vector<16xf32>
    %20 = vector.multi_reduction <add>, %19, %cst_11 [1] : vector<16x128xf32> to vector<16xf32>
    %21 = vector.shape_cast %20 : vector<16xf32> to vector<16x1xf32>
    %22 = arith.addf %16, %21 : vector<16x1xf32>
    %c0_12 = arith.constant 0 : index
    %c0_13 = arith.constant 0 : index
    %23 = vector.load %arg9[%c0_12, %c0_13] : memref<16x1xf32, #tpu.memory_space<vmem>>, vector<16x1xf32>
    tpu.vector_store %arg9[%c0_12, %c0_13], %22 {strides = array<i32>} : memref<16x1xf32, #tpu.memory_space<vmem>>, vector<16x1xf32>,
    %c0_14 = arith.constant 0 : index
    %c0_15 = arith.constant 0 : index
    %24 = vector.load %arg8[%c0_14, %c0_15] : memref<16x1xf32, #tpu.memory_space<vmem>>, vector<16x1xf32>
    tpu.vector_store %arg8[%c0_14, %c0_15], %12 {strides = array<i32>} : memref<16x1xf32, #tpu.memory_space<vmem>>, vector<16x1xf32>,
    %25 = vector.broadcast %12 : vector<16x1xf32> to vector<16x128xf32>
    %26 = arith.subf %8, %25 : vector<16x128xf32>
    %c0_16 = arith.constant 0 : index
    %c0_17 = arith.constant 0 : index
    %27 = vector.load %arg5[%c0_16, %c0_17] : memref<16x128xf32, #tpu.memory_space<vmem>>, vector<16x128xf32>
    tpu.vector_store %arg5[%c0_16, %c0_17], %26 {strides = array<i32>} : memref<16x128xf32, #tpu.memory_space<vmem>>, vector<16x128xf32>,
    %28 = vector.shape_cast %12 : vector<16x1xf32> to vector<1x16x1xf32>
    %c0_18 = arith.constant 0 : index
    %c0_19 = arith.constant 0 : index
    %c0_20 = arith.constant 0 : index
    %29 = vector.load %arg6[%c0_18, %c0_19, %c0_20] : memref<1x16x1xf32, #tpu.memory_space<vmem>>, vector<1x16x1xf32>
    tpu.vector_store %arg6[%c0_18, %c0_19, %c0_20], %28 {strides = array<i32>} : memref<1x16x1xf32, #tpu.memory_space<vmem>>, vector<1x16x1xf32>,
    %c0_i32_21 = arith.constant 0 : i32
    %30 = arith.cmpi eq, %arg1, %c0_i32_21 : i32
    %31 = arith.extui %30 : i1 to i32
    %c0_i32_22 = arith.constant 0 : i32
    %32 = arith.cmpi ne, %31, %c0_i32_22 : i32
    scf.if %32 {
      %c0_23 = arith.constant 0 : index
      %c0_24 = arith.constant 0 : index
      %33 = vector.load %arg8[%c0_23, %c0_24] : memref<16x1xf32, #tpu.memory_space<vmem>>, vector<16x1xf32>
      %c0_25 = arith.constant 0 : index
      %c0_26 = arith.constant 0 : index
      %34 = vector.load %arg9[%c0_25, %c0_26] : memref<16x1xf32, #tpu.memory_space<vmem>>, vector<16x1xf32>
      %35 = math.log %34 : vector<16x1xf32>
      %36 = arith.addf %33, %35 : vector<16x1xf32>
      %c0_27 = arith.constant 0 : index
      %c0_28 = arith.constant 0 : index
      %37 = vector.load %arg7[%c0_27, %c0_28] : memref<16x1xf32, #tpu.memory_space<vmem>>, vector<16x1xf32>
      tpu.vector_store %arg7[%c0_27, %c0_28], %36 {strides = array<i32>} : memref<16x1xf32, #tpu.memory_space<vmem>>, vector<16x1xf32>,
    } else {
    }
    return
  }
  func.func @transform_0(%arg0: i32, %arg1: i32) -> (i32, i32) {
    %c0_i32 = arith.constant 0 : i32
    %c0_i32_0 = arith.constant 0 : i32
    return %arg0, %c0_i32 : i32, i32
  }
  func.func @transform_1(%arg0: i32, %arg1: i32) -> (i32, i32) {
    %c0_i32 = arith.constant 0 : i32
    %c0_i32_0 = arith.constant 0 : i32
    return %c0_i32, %arg1 : i32, i32
  }
  func.func @transform_2(%arg0: i32, %arg1: i32) -> (i32, i32) {
    %c0_i32 = arith.constant 0 : i32
    %c0_i32_0 = arith.constant 0 : i32
    return %c0_i32, %arg1 : i32, i32
  }
  func.func @transform_3(%arg0: i32, %arg1: i32) -> (i32, i32) {
    %c0_i32 = arith.constant 0 : i32
    return %arg0, %arg1 : i32, i32
  }
  func.func @transform_4(%arg0: i32, %arg1: i32) -> (i32, i32, i32) {
    %c0_i32 = arith.constant 0 : i32
    %c0_i32_0 = arith.constant 0 : i32
    return %arg1, %arg0, %c0_i32 : i32, i32, i32
  }
  func.func @transform_5(%arg0: i32, %arg1: i32) -> (i32, i32) {
    %c0_i32 = arith.constant 0 : i32
    %c0_i32_0 = arith.constant 0 : i32
    return %arg0, %c0_i32 : i32, i32
  }
}

</mosaic_0001>

<llo_original>
// kernel: tpu_custom_call.1
$region0: #{tpu_custom_call.1}
  #allocation0 [shape = 'u32[]', space=smem, size = 0x4, offset = 0x4, fixed_abs, tag = 'smem constant byte address 0x4 - core index']
  #allocation1 [shape = 'u32[72,128]{1,0:T(1,128)}', space=vmem, size = 0x9000, scoped, tag = 'internal scratch']
  #allocation2 [shape = 'f32[16,1]{1,0:T(8,128)}', space=vmem, size = 0x2000, scoped, tag = 'scratch operand']
  #allocation3 [shape = 'f32[16,1]{1,0:T(8,128)}', space=vmem, size = 0x2000, scoped, tag = 'scratch operand']
  %s0 = inlined_call_operand.hbm [shape: bf16[16,32], index: 0, kind: input, shape index: {}]
  %s1 = inlined_call_operand.hbm [shape: bf16[32,128], index: 1, kind: input, shape index: {}]
  %s2 = inlined_call_operand.vmem [shape: f32[1,128], index: 2, kind: input, shape index: {}]
  %s3 = inlined_call_operand.hbm [shape: f32[16,128], index: 3, kind: output, shape index: {0}]
  %s4 = inlined_call_operand.vmem [shape: f32[1,16,1], index: 4, kind: output, shape index: {1}]
  %s5 = inlined_call_operand.vmem [shape: f32[16,1], index: 5, kind: output, shape index: {2}]
  %6 = xla_tuple %s3, %s4, %s5
  %s7 = sld [smem:[#allocation0]]
  $region54: #{tpu_custom_call.1} parent=0
    _
  %s9 = ssub.s32 1, %s7
  %s10 = scalar_select 0, %s9, %s7
  $region1: #{tpu_custom_call.1} parent=0
    #allocation4 [shape = 'u8[4096]{0}', space=vmem, size = 0x1000, scoped, tag = 'input window, operand 0, single buffered']
    #allocation5 [shape = 's32[1]{0}', space=sflag, size = 0x4, scoped, tag = 'scoped memory for tpu_custom_call.1']
    #allocation6 [shape = 's32[1]{0}', space=sflag, size = 0x4, scoped, tag = 'scoped memory for tpu_custom_call.1']
    #allocation7 [shape = 'u8[8192]{0}', space=vmem, size = 0x2000, scoped, tag = 'input window, operand 1, single buffered']
    #allocation8 [shape = 's32[1]{0}', space=sflag, size = 0x4, scoped, tag = 'scoped memory for tpu_custom_call.1']
    #allocation9 [shape = 'u8[8192]{0}', space=vmem, size = 0x2000, scoped, tag = 'output window, operand 0, single buffered']
    %11 = vsyncpa [#allocation5], 0
    %12 = vsyncpa [#allocation8], 0
    %13 = vsyncpa [#allocation6], 0
    // Predicated region
    $region2: #{tpu_custom_call.1} parent=1 // pred_check
      _
    $region3: #{tpu_custom_call.1} parent=1 // pred_check_branch
      %15 = sbr.rel (0) target = $region5
    $region4: #{tpu_custom_call.1} parent=1 // pred_region
      %17 = vsyncadd [#allocation5], 0
      %s18 = sshll.u32 %s0, 4
      %s19 = int_to_ptr.hbm [resolvable:$true] %s18
      %s20 = sshll.u32 [#allocation4], 4
      %s21 = int_to_ptr.vmem [resolvable:$true] %s20
      %26 = dma.hbm_to_vmem [thread:$0]  %s19, 128, %s21, [#allocation5], 64, 64, 4
    $region5: #{tpu_custom_call.1} parent=1 // pred_fallthru
      _
    // Predicated region
    $region6: #{tpu_custom_call.1} parent=1 // pred_check
      _
    $region7: #{tpu_custom_call.1} parent=1 // pred_check_branch
      %28 = sbr.rel (0) target = $region9
    $region8: #{tpu_custom_call.1} parent=1 // pred_region
      %30 = vsyncadd [#allocation8], 0
      %s31 = sshll.u32 %s1, 4
      %s32 = int_to_ptr.hbm [resolvable:$true] %s31
      %s33 = sshll.u32 [#allocation7], 4
      %s34 = int_to_ptr.vmem [resolvable:$true] %s33
      %39 = dma.hbm_to_vmem [thread:$0]  %s32, 256, %s34, [#allocation8], 64, 64, 4
    $region9: #{tpu_custom_call.1} parent=1 // pred_fallthru
      _
    // Predicated region
    $region10: #{tpu_custom_call.1} parent=1 // pred_check
      _
    $region11: #{tpu_custom_call.1} parent=1 // pred_check_branch
      %41 = sbr.rel (0) target = $region13
    $region12: #{tpu_custom_call.1} parent=1 // pred_region
      _
    $region13: #{tpu_custom_call.1} parent=1 // pred_fallthru
      _
    // Predicated region
    $region14: #{tpu_custom_call.1} parent=1 // pred_check
      _
    $region15: #{tpu_custom_call.1} parent=1 // pred_check_branch
      %43 = sbr.rel (0) target = $region17
    $region16: #{tpu_custom_call.1} parent=1 // pred_region
      %45 = dma.done [#allocation5], 128
    $region17: #{tpu_custom_call.1} parent=1 // pred_fallthru
      _
    // Predicated region
    $region18: #{tpu_custom_call.1} parent=1 // pred_check
      _
    $region19: #{tpu_custom_call.1} parent=1 // pred_check_branch
      %47 = sbr.rel (0) target = $region21
    $region20: #{tpu_custom_call.1} parent=1 // pred_region
      %49 = dma.done [#allocation8], 256
    $region21: #{tpu_custom_call.1} parent=1 // pred_fallthru
      _
    %p51 = scmp.eq.s32.totalorder 0, 0
    // Predicated region
    $region22: #{tpu_custom_call.1} parent=1 // pred_check
      %p52 = pneg %p51
    $region23: #{tpu_custom_call.1} parent=1 // pred_check_branch
      %54 = sbr.rel (%p52) target = $region25
    $region24: #{tpu_custom_call.1} parent=1 // pred_region
      %vm55 = vcmask 7168
      %56 = vst.msk [vmem:[#allocation2] sm:$0xff] %vm55, -inf
      %57 = vst.msk [vmem:[#allocation2 + $0x8] sm:$0xff] %vm55, -inf
      %58 = vst.msk [vmem:[#allocation3] sm:$0xff] %vm55, 0.0
      %59 = vst.msk [vmem:[#allocation3 + $0x8] sm:$0xff] %vm55, 0.0
    $region25: #{tpu_custom_call.1} parent=1 // pred_fallthru
      _
    %v60 = vld [vmem:[#allocation4] sm:$0xf]
    %v61 = vld [vmem:[#allocation4 + $0x4] sm:$0xf]
    %v62 = vld [vmem:[#allocation7] sm:$0xf]
    %v63 = vld [vmem:[#allocation7 + $0x4] sm:$0xf]
    %v64 = vld [vmem:[#allocation7 + $0x8] sm:$0xf]
    %v65 = vld [vmem:[#allocation7 + $0xc] sm:$0xf]
    %v66 = vld [vmem:[%s2] sm:$0x1]
    %v68 = vperm.slane %v66, 0
    %v72 = vunpack.c.l.b16 %v60
    %v73 = vunpack.c.l.b16 %v61
    %v74 = vpack.c.b16 %v73, %v72
    %v79 = vunpack.c.l.b16 %v62
    %v80 = vunpack.c.l.b16 %v63
    %v81 = vunpack.c.l.b16 %v64
    %v82 = vunpack.c.l.b16 %v65
    %v83 = vpack.c.b16 %v80, %v79
    %v84 = vpack.c.b16 %v82, %v81
    %vm87 = vcmask 261120
    %v89 = vsel %vm87, %v74, 0
    %91 = vmatpush.bf16.msra.mxu0 0
    %92 = vmatpush.bf16.msra.mxu0 0
    %93 = vmatpush.bf16.msra.mxu0 0
    %94 = vmatpush.bf16.msra.mxu0 0
    %95 = vmatpush.bf16.msra.mxu0 0
    %96 = vmatpush.bf16.msra.mxu0 0
    %97 = vmatpush.bf16.msra.mxu0 %v84
    %98 = vmatpush.bf16.msra.mxu0 %v83
    %99 = vmatmul.bf16.gmra.mxu0 %v89
    %v100 = vpop.f32.mrf.mxu0
    %v101 = vadd.f32 %v68, %v100
    %v102 = vpop.f32.mrf.mxu0
    %v103 = vadd.f32 %v68, %v102
    %104 = vdwg.mxu0
    %v105 = vld [vmem:[#allocation2] sm:$0xff]
    %v106 = vld [vmem:[#allocation2 + $0x8] sm:$0xff]
    %107 = vmax.xlane.f32.xlu0 %v101
    %v108 = vpop.xlane.xlu0 %107
    %109 = vmax.xlane.f32.xlu0 %v103
    %v110 = vpop.xlane.xlu0 %109
    %v111 = vmax.f32 %v105, %v108
    %v112 = vmax.f32 %v106, %v110
    %v113 = vld [vmem:[#allocation3] sm:$0xff]
    %v114 = vld [vmem:[#allocation3 + $0x8] sm:$0xff]
    %v115 = vsub.f32 %v105, %v111
    %v116 = vsub.f32 %v106, %v112
    %v117 = vmul.f32 %v115, 1.442695
    %v118 = vpow.pop %v117
    %v119 = vmul.f32 %v116, 1.442695
    %v120 = vpow.pop %v119
    %v121 = vmul.f32 %v113, %v118
    %v122 = vmul.f32 %v114, %v120
    %124 = vset.pattern.permute.xlu0 0
    %125 = vperm.xlu0 %124, %v111
    %v126 = vpop.permute.xlu0 %125
    %129 = vset.pattern.permute.xlu0 0
    %130 = vperm.xlu0 %129, %v112
    %v131 = vpop.permute.xlu0 %130
    %v133 = vsub.f32 %v101, %v126
    %v134 = vsub.f32 %v103, %v131
    %v135 = vmul.f32 %v133, 1.442695
    %v136 = vpow.pop %v135
    %v137 = vmul.f32 %v134, 1.442695
    %v138 = vpow.pop %v137
    %139 = vadd.xlane.f32.xlu0 %v136
    %v140 = vpop.xlane.xlu0 %139
    %141 = vadd.xlane.f32.xlu0 %v138
    %v142 = vpop.xlane.xlu0 %141
    %v143 = vadd.f32 %v121, %v140
    %v144 = vadd.f32 %v122, %v142
    %vm145 = vcmask 7168
    %146 = vst.msk [vmem:[#allocation3] sm:$0xff] %vm145, %v143
    %147 = vst.msk [vmem:[#allocation3 + $0x8] sm:$0xff] %vm145, %v144
    %148 = vst.msk [vmem:[#allocation2] sm:$0xff] %vm145, %v111
    %149 = vst.msk [vmem:[#allocation2 + $0x8] sm:$0xff] %vm145, %v112
    %150 = vst [vmem:[#allocation9] sm:$0xff] %v133
    %151 = vst [vmem:[#allocation9 + $0x8] sm:$0xff] %v134
    %152 = vst.msk [vmem:[%s4] sm:$0xff] %vm145, %v111
    %153 = vst.msk [vmem:[%s4 + $0x8] sm:$0xff] %vm145, %v112
    // Predicated region
    $region26: #{tpu_custom_call.1} parent=1 // pred_check
      %p154 = pneg %p51
    $region27: #{tpu_custom_call.1} parent=1 // pred_check_branch
      %156 = sbr.rel (%p154) target = $region29
    $region28: #{tpu_custom_call.1} parent=1 // pred_region
      %v157 = vld [vmem:[#allocation2] sm:$0xff]
      %v158 = vld [vmem:[#allocation2 + $0x8] sm:$0xff]
      %v159 = vld [vmem:[#allocation3] sm:$0xff]
      %v160 = vld [vmem:[#allocation3 + $0x8] sm:$0xff]
      %v161 = vlog2.pop %v159
      %v162 = vmul.f32 %v161, 0.6931472
      %v163 = vlog2.pop %v160
      %v164 = vmul.f32 %v163, 0.6931472
      %v165 = vadd.f32 %v157, %v162
      %v166 = vadd.f32 %v158, %v164
      %167 = vst.msk [vmem:[%s5] sm:$0xff] %vm145, %v165
      %168 = vst.msk [vmem:[%s5 + $0x8] sm:$0xff] %vm145, %v166
    $region29: #{tpu_custom_call.1} parent=1 // pred_fallthru
      _
    // Predicated region
    $region30: #{tpu_custom_call.1} parent=1 // pred_check
      _
    $region31: #{tpu_custom_call.1} parent=1 // pred_check_branch
      %170 = sbr.rel (0) target = $region33
    $region32: #{tpu_custom_call.1} parent=1 // pred_region
      %172 = vsyncadd [#allocation6], 0
      %s173 = sshll.u32 [#allocation9], 4
      %s174 = int_to_ptr.vmem [resolvable:$true] %s173
      %s175 = sshll.u32 %s3, 4
      %s176 = int_to_ptr.hbm [resolvable:$true] %s175
      %181 = dma.vmem_to_hbm [thread:$0]  %s174, 256, %s176, [#allocation6], 128, 128, 8
    $region33: #{tpu_custom_call.1} parent=1 // pred_fallthru
      _
    // Predicated region
    $region34: #{tpu_custom_call.1} parent=1 // pred_check
      _
    $region35: #{tpu_custom_call.1} parent=1 // pred_check_branch
      %183 = sbr.rel (0) target = $region37
    $region36: #{tpu_custom_call.1} parent=1 // pred_region
      _
    $region37: #{tpu_custom_call.1} parent=1 // pred_fallthru
      _
    // Predicated region
    $region38: #{tpu_custom_call.1} parent=1 // pred_check
      _
    $region39: #{tpu_custom_call.1} parent=1 // pred_check_branch
      %185 = sbr.rel (0) target = $region41
    $region40: #{tpu_custom_call.1} parent=1 // pred_region
      _
    $region41: #{tpu_custom_call.1} parent=1 // pred_fallthru
      _
    // Predicated region
    $region42: #{tpu_custom_call.1} parent=1 // pred_check
      _
    $region43: #{tpu_custom_call.1} parent=1 // pred_check_branch
      %187 = sbr.rel (0) target = $region45
    $region44: #{tpu_custom_call.1} parent=1 // pred_region
      %189 = dma.done [#allocation6], 256
    $region45: #{tpu_custom_call.1} parent=1 // pred_fallthru
      _
    // Predicated region
    $region46: #{tpu_custom_call.1} parent=1 // pred_check
      _
    $region47: #{tpu_custom_call.1} parent=1 // pred_check_branch
      %191 = sbr.rel (0) target = $region49
    $region48: #{tpu_custom_call.1} parent=1 // pred_region
      _
    $region49: #{tpu_custom_call.1} parent=1 // pred_fallthru
      _
    // Predicated region
    $region50: #{tpu_custom_call.1} parent=1 // pred_check
      _
    $region51: #{tpu_custom_call.1} parent=1 // pred_check_branch
      %193 = sbr.rel (0) target = $region53
    $region52: #{tpu_custom_call.1} parent=1 // pred_region
      _
    $region53: #{tpu_custom_call.1} parent=1 // pred_fallthru
      _
    %194 = vsyncpa [#allocation5], 1
    %195 = vsyncpa [#allocation8], 1
    %196 = vsyncpa [#allocation6], 1

</llo_original>
